<compile_context>
chip_gen: v7x
topology: tpu7x:2x2x1
jax: 0.10.0
libtpu: 0.0.40
codegen_flags: <defaults>
</compile_context>

<pallas_src>
import functools

import jax
import jax.numpy as jnp
from jax import lax
from jax.experimental import pallas as pl
from jax.experimental.pallas import tpu as pltpu


def _siglip_kernel(scale_ref, bias_ref, img_ref, txt_ref, out_ref, *, tm, n):
    i = pl.program_id(0)

    # [tm, D] x [N, D] contracted on D -> [tm, N]; contracting-last-dim RHS
    # feeds the MXU directly (no per-step XLU transpose).
    logits = lax.dot_general(
        img_ref[...], txt_ref[...],
        dimension_numbers=(((1,), (1,)), ((), ())),
        preferred_element_type=jnp.float32)
    logits = logits * scale_ref[0] + bias_ref[0]

    # labels = 2*eye(N) - 1 for this row block: +1 on the global diagonal,
    # -1 elsewhere.  z = labels * logits expressed as a select (one less mul).
    rows = lax.broadcasted_iota(jnp.int32, (tm, n), 0) + i * tm
    cols = lax.broadcasted_iota(jnp.int32, (tm, n), 1)
    z = jnp.where(rows == cols, logits, -logits)

    # numerically stable log-sigmoid: min(z, 0) - log1p(exp(-|z|))
    logsig = jnp.minimum(z, 0.0) - jnp.log1p(jnp.exp(-jnp.abs(z)))

    # Per-row-block partial sum (independent across grid steps -> "parallel").
    out_ref[0, 0] = -jnp.sum(logsig)


def _pick_tm(n, d, itemsize, max_tm=256, vmem_budget=48 << 20):
    """Largest row-block size: multiple of 8 (or == n), divides n, fits VMEM."""
    candidates = [t for t in range(min(n, max_tm), 0, -1)
                  if n % t == 0 and (t % 8 == 0 or t == n)]
    if not candidates:
        return n
    for t in candidates:
        # double-buffered img tile + resident text + f32 logits slab (+slack)
        est = 2 * (t * d * itemsize) + 2 * (n * d * itemsize) + 2 * (t * n * 4)
        if est <= vmem_budget:
            return t
    return candidates[-1]


def siglip_loss(image_features, text_features, logit_scale, logit_bias,
                siglip_bidir=True, tm=None):
    # TODO(synk): world_size > 1 path (GatherLayer all-gather) not implemented;
    # single-host semantics only.
    n, d = image_features.shape
    assert text_features.shape == (n, d)

    itemsize = jnp.dtype(image_features.dtype).itemsize
    if tm is None:
        tm = _pick_tm(n, d, itemsize)
    assert n % tm == 0
    grid_m = n // tm

    # Hoist the scalar exp out of the kernel.
    scale_exp = jnp.exp(jnp.asarray(logit_scale, jnp.float32)).reshape((1,))
    bias = jnp.asarray(logit_bias, jnp.float32).reshape((1,))

    kernel = functools.partial(_siglip_kernel, tm=tm, n=n)

    # VMEM sizing: stay well under v7x's 64 MiB physical.
    vmem_need = 2 * (tm * d * itemsize) + 2 * (n * d * itemsize) + 2 * (tm * n * 4)
    vmem_limit = int(min(max(vmem_need + (4 << 20), 16 << 20), 56 << 20))

    cost = pl.CostEstimate(
        flops=2 * n * n * d,
        transcendentals=2 * n * n,
        bytes_accessed=(n * d * itemsize)            # image, streamed once
                       + (n * d * itemsize)          # text, resident (one DMA)
                       + grid_m * 4)                 # partial sums

    partials = pl.pallas_call(
        kernel,
        out_shape=jax.ShapeDtypeStruct((grid_m, 1), jnp.float32),
        grid_spec=pltpu.PrefetchScalarGridSpec(
            num_scalar_prefetch=0,
            grid=(grid_m,),
            in_specs=[
                pl.BlockSpec(memory_space=pltpu.SMEM),            # exp(logit_scale)
                pl.BlockSpec(memory_space=pltpu.SMEM),            # logit_bias
                pl.BlockSpec((tm, d), lambda i: (i, 0)),          # image row block
                pl.BlockSpec((n, d), lambda i: (0, 0)),           # text, VMEM-resident
            ],
            out_specs=pl.BlockSpec((1, 1), lambda i: (i, 0),
                                   memory_space=pltpu.SMEM),
        ),
        compiler_params=pltpu.CompilerParams(
            dimension_semantics=("parallel",),
            vmem_limit_bytes=vmem_limit),
        cost_estimate=cost,
    )(scale_exp, bias, image_features, text_features)

    s = jnp.sum(partials)
    if siglip_bidir:
        # labels symmetric & logits square -> the two bidir terms are equal.
        return (s / n + s / n) / 2.0
    return s / n


def siglip_loss_ref(image_features, text_features, logit_scale, logit_bias,
                    siglip_bidir=True):
    logits = image_features @ text_features.T * jnp.exp(logit_scale) + logit_bias
    n = logits.shape[0]
    labels = 2.0 * jnp.eye(n, dtype=jnp.float32) - 1.0
    logsig = jax.nn.log_sigmoid
    if siglip_bidir:
        li = -jnp.sum(logsig(labels * logits)) / logits.shape[0]
        lt = -jnp.sum(logsig(labels * logits.T)) / logits.shape[1]
        return (li + lt) / 2.0
    return -jnp.sum(logsig(labels * logits)) / logits.shape[0]


if __name__ == "__main__":
    key = jax.random.PRNGKey(0)
    k1, k2 = jax.random.split(key)

    N, D = 16, 128
    image_features = jax.random.normal(k1, (N, D), dtype=jnp.float32)
    text_features = jax.random.normal(k2, (N, D), dtype=jnp.float32)

    # standard SigLIP init: scale = log(10), bias = -10
    logit_scale = jnp.float32(jnp.log(10.0))
    logit_bias = jnp.float32(-10.0)
    siglip_bidir = True

    loss = siglip_loss(image_features, text_features, logit_scale, logit_bias,
                       siglip_bidir=siglip_bidir)
    loss = jax.block_until_ready(loss)

    ref = siglip_loss_ref(image_features, text_features, logit_scale, logit_bias,
                          siglip_bidir=siglip_bidir)
    assert jnp.allclose(loss, ref, rtol=1e-5, atol=1e-5), (loss, ref)

    print("KERNEL_OK")
</pallas_src>

<mosaic_0001>
module attributes {stable_mosaic.version = 11 : i64} {
  func.func @_siglip_kernel(%arg0: i32, %arg1: memref<1xf32, #tpu.memory_space<smem>>, %arg2: memref<1xf32, #tpu.memory_space<smem>>, %arg3: memref<16x128xf32, #tpu.memory_space<vmem>>, %arg4: memref<16x128xf32, #tpu.memory_space<vmem>>, %arg5: memref<1x1xf32, #tpu.memory_space<smem>>) attributes {dimension_semantics = [#tpu.dimension_semantics<parallel>], iteration_bounds = array<i64: 1>, scalar_prefetch = 0 : i64, scratch_operands = 0 : i64, tpu.core_type = #tpu.core_type<tc>, window_params = [{transform_indices = @transform_0, window_bounds = array<i64: 1>}, {transform_indices = @transform_1, window_bounds = array<i64: 1>}, {transform_indices = @transform_2, window_bounds = array<i64: 16, 128>}, {pipeline_mode = #tpu.pipeline_mode<synchronous>, transform_indices = @transform_3, window_bounds = array<i64: 16, 128>}, {transform_indices = @transform_4, window_bounds = array<i64: 1, 1>}]} {
    %c0 = arith.constant 0 : index
    %c0_0 = arith.constant 0 : index
    %0 = vector.load %arg3[%c0, %c0_0] : memref<16x128xf32, #tpu.memory_space<vmem>>, vector<16x128xf32>
    %c0_1 = arith.constant 0 : index
    %c0_2 = arith.constant 0 : index
    %1 = vector.load %arg4[%c0_1, %c0_2] : memref<16x128xf32, #tpu.memory_space<vmem>>, vector<16x128xf32>
    %cst = arith.constant dense<0.000000e+00> : vector<16x16xf32>
    %2 = tpu.matmul %0, %1, %cst {dimension_numbers = #tpu.dot_dimension_numbers<[1], [1], [0], [0], [0, 0, 1, 0], [], []>} : vector<16x128xf32>, vector<16x128xf32>, vector<16x16xf32> -> vector<16x16xf32>
    %c0_3 = arith.constant 0 : index
    %3 = memref.load %arg1[%c0_3] : memref<1xf32, #tpu.memory_space<smem>>
    %4 = vector.broadcast %3 : f32 to vector<16x16xf32>
    %5 = arith.mulf %2, %4 : vector<16x16xf32>
    %c0_4 = arith.constant 0 : index
    %6 = memref.load %arg2[%c0_4] : memref<1xf32, #tpu.memory_space<smem>>
    %7 = vector.broadcast %6 : f32 to vector<16x16xf32>
    %8 = arith.addf %5, %7 : vector<16x16xf32>
    %9 = tpu.iota {dimensions = array<i32: 0>} : vector<16x16xi32>
    %c16_i32 = arith.constant 16 : i32
    %10 = arith.muli %arg0, %c16_i32 : i32
    %11 = vector.broadcast %10 : i32 to vector<16x16xi32>
    %12 = arith.addi %9, %11 : vector<16x16xi32>
    %13 = tpu.iota {dimensions = array<i32: 1>} : vector<16x16xi32>
    %14 = arith.cmpi eq, %12, %13 : vector<16x16xi32>
    %cst_5 = arith.constant 0.000000e+00 : f32
    %15 = vector.broadcast %cst_5 : f32 to vector<16x16xf32>
    %16 = arith.subf %15, %8 : vector<16x16xf32>
    %17 = arith.select %14, %8, %16 : vector<16x16xi1>, vector<16x16xf32>
    %cst_6 = arith.constant 0.000000e+00 : f32
    %18 = vector.broadcast %cst_6 : f32 to vector<16x16xf32>
    %19 = arith.minimumf %17, %18 : vector<16x16xf32>
    %20 = math.absf %17 : vector<16x16xf32>
    %cst_7 = arith.constant 0.000000e+00 : f32
    %21 = vector.broadcast %cst_7 : f32 to vector<16x16xf32>
    %22 = arith.subf %21, %20 : vector<16x16xf32>
    %23 = math.exp %22 : vector<16x16xf32>
    %24 = math.log1p %23 : vector<16x16xf32>
    %25 = arith.subf %19, %24 : vector<16x16xf32>
    %26 = vector.shape_cast %25 : vector<16x16xf32> to vector<1x16x16xf32>
    %cst_8 = arith.constant dense<0.000000e+00> : vector<1xf32>
    %27 = vector.multi_reduction <add>, %26, %cst_8 [1, 2] : vector<1x16x16xf32> to vector<1xf32>
    %28 = vector.shape_cast %27 : vector<1xf32> to vector<1x1x1xf32>
    %29 = vector.extract %28[0, 0, 0] : f32 from vector<1x1x1xf32>
    %cst_9 = arith.constant 0.000000e+00 : f32
    %30 = arith.subf %cst_9, %29 : f32
    %c0_10 = arith.constant 0 : index
    %c0_11 = arith.constant 0 : index
    %31 = memref.load %arg5[%c0_10, %c0_11] : memref<1x1xf32, #tpu.memory_space<smem>>
    memref.store %30, %arg5[%c0_10, %c0_11] : memref<1x1xf32, #tpu.memory_space<smem>>
    return
  }
  func.func @transform_0(%arg0: i32) -> i32 {
    %c0_i32 = arith.constant 0 : i32
    %c0_i32_0 = arith.constant 0 : i32
    return %c0_i32 : i32
  }
  func.func @transform_1(%arg0: i32) -> i32 {
    %c0_i32 = arith.constant 0 : i32
    %c0_i32_0 = arith.constant 0 : i32
    return %c0_i32 : i32
  }
  func.func @transform_2(%arg0: i32) -> (i32, i32) {
    %c0_i32 = arith.constant 0 : i32
    %c0_i32_0 = arith.constant 0 : i32
    return %arg0, %c0_i32 : i32, i32
  }
  func.func @transform_3(%arg0: i32) -> (i32, i32) {
    %c0_i32 = arith.constant 0 : i32
    %c0_i32_0 = arith.constant 0 : i32
    %c0_i32_1 = arith.constant 0 : i32
    return %c0_i32, %c0_i32_0 : i32, i32
  }
  func.func @transform_4(%arg0: i32) -> (i32, i32) {
    %c0_i32 = arith.constant 0 : i32
    %c0_i32_0 = arith.constant 0 : i32
    return %arg0, %c0_i32 : i32, i32
  }
}

</mosaic_0001>

<llo_original>
// kernel: tpu_custom_call.1
$region0: #{tpu_custom_call.1}
  #allocation0 [shape = 'u32[]', space=smem, size = 0x4, offset = 0x4, fixed_abs, tag = 'smem constant byte address 0x4 - core index']
  #allocation1 [shape = 'u32[144,128]{1,0:T(1,128)}', space=vmem, size = 0x12000, scoped, tag = 'internal scratch']
  #allocation2 [shape = 'f32[1]{0:T(128)S(6)}', space=smem, size = 0x200, scoped, tag = 'scoped memory for tpu_custom_call.1']
  #allocation3 [shape = 'f32[1]{0:T(128)S(6)}', space=smem, size = 0x200, scoped, tag = 'scoped memory for tpu_custom_call.1']
  %s0 = inlined_call_operand.<no memory space> [shape: f32[1], index: 0, kind: input, shape index: {}]
  %s1 = inlined_call_operand.<no memory space> [shape: f32[1], index: 1, kind: input, shape index: {}]
  %s2 = inlined_call_operand.hbm [shape: f32[16,128], index: 2, kind: input, shape index: {}]
  %s3 = inlined_call_operand.hbm [shape: f32[16,128], index: 3, kind: input, shape index: {}]
  %s4 = inlined_call_operand.hbm [shape: f32[1,1], index: 4, kind: output, shape index: {}]
  %s5 = sld [smem:[#allocation0]]
  $region34: #{tpu_custom_call.1} parent=0
    _
  %s7 = ssub.s32 1, %s5
  %s8 = scalar_select 0, %s7, %s5
  %9 = sst [smem:[#allocation2]] %s0
  %10 = sst [smem:[#allocation3]] %s1
  $region1: #{tpu_custom_call.1} parent=0
    #allocation4 [shape = 'u8[8192]{0}', space=vmem, size = 0x2000, scoped, tag = 'input window, operand 2, single buffered']
    #allocation5 [shape = 's32[1]{0}', space=sflag, size = 0x4, scoped, tag = 'scoped memory for tpu_custom_call.1']
    #allocation6 [shape = 's32[1]{0}', space=sflag, size = 0x4, scoped, tag = 'scoped memory for tpu_custom_call.1']
    #allocation7 [shape = 'u8[8192]{0}', space=vmem, size = 0x2000, scoped, tag = 'input window, operand 3, single buffered']
    #allocation8 [shape = 's32[1]{0}', space=sflag, size = 0x4, scoped, tag = 'scoped memory for tpu_custom_call.1']
    #allocation9 [shape = 'u8[512]{0}', space=smem, size = 0x200, scoped, tag = 'output window, operand 0, single buffered']
    %11 = vsyncpa [#allocation5], 0
    %12 = vsyncpa [#allocation8], 0
    %13 = vsyncpa [#allocation6], 0
    // Predicated region
    $region2: #{tpu_custom_call.1} parent=1 // pred_check
      _
    $region3: #{tpu_custom_call.1} parent=1 // pred_check_branch
      %15 = sbr.rel (0) target = $region5
    $region4: #{tpu_custom_call.1} parent=1 // pred_region
      _
    $region5: #{tpu_custom_call.1} parent=1 // pred_fallthru
      _
    // Predicated region
    $region6: #{tpu_custom_call.1} parent=1 // pred_check
      _
    $region7: #{tpu_custom_call.1} parent=1 // pred_check_branch
      %17 = sbr.rel (0) target = $region9
    $region8: #{tpu_custom_call.1} parent=1 // pred_region
      _
    $region9: #{tpu_custom_call.1} parent=1 // pred_fallthru
      _
    // Predicated region
    $region10: #{tpu_custom_call.1} parent=1 // pred_check
      _
    $region11: #{tpu_custom_call.1} parent=1 // pred_check_branch
      %19 = sbr.rel (0) target = $region13
    $region12: #{tpu_custom_call.1} parent=1 // pred_region
      %s21 = ssub.s32 256, 256
      %22 = vsyncadd [#allocation5], %s21
      %s23 = sshll.u32 [#allocation4], 4
      %s24 = int_to_ptr.vmem [resolvable:$true] %s23
      %29 = dma.hbm_to_vmem [thread:$0]  %s2, 256, %s24, [#allocation5], 128, 128, 8
    $region13: #{tpu_custom_call.1} parent=1 // pred_fallthru
      _
    // Predicated region
    $region14: #{tpu_custom_call.1} parent=1 // pred_check
      _
    $region15: #{tpu_custom_call.1} parent=1 // pred_check_branch
      %31 = sbr.rel (0) target = $region17
    $region16: #{tpu_custom_call.1} parent=1 // pred_region
      %s33 = ssub.s32 256, 256
      %34 = vsyncadd [#allocation8], %s33
      %s35 = sshll.u32 [#allocation7], 4
      %s36 = int_to_ptr.vmem [resolvable:$true] %s35
      %41 = dma.hbm_to_vmem [thread:$0]  %s3, 256, %s36, [#allocation8], 128, 128, 8
    $region17: #{tpu_custom_call.1} parent=1 // pred_fallthru
      _
    // Predicated region
    $region18: #{tpu_custom_call.1} parent=1 // pred_check
      _
    $region19: #{tpu_custom_call.1} parent=1 // pred_check_branch
      %43 = sbr.rel (0) target = $region21
    $region20: #{tpu_custom_call.1} parent=1 // pred_region
      %44 = dma.done [#allocation5], 256
    $region21: #{tpu_custom_call.1} parent=1 // pred_fallthru
      _
    // Predicated region
    $region22: #{tpu_custom_call.1} parent=1 // pred_check
      _
    $region23: #{tpu_custom_call.1} parent=1 // pred_check_branch
      %46 = sbr.rel (0) target = $region25
    $region24: #{tpu_custom_call.1} parent=1 // pred_region
      %47 = dma.done [#allocation8], 256
    $region25: #{tpu_custom_call.1} parent=1 // pred_fallthru
      _
    %v48 = vld [vmem:[#allocation4] sm:$0xff]
    %v49 = vld [vmem:[#allocation4 + $0x8] sm:$0xff]
    %v50 = vld [vmem:[#allocation7] sm:$0xff]
    %v51 = vld [vmem:[#allocation7 + $0x8] sm:$0xff]
    %52 = vmatprep.subr.mxu0 0.0
    %53 = vmatpush1.xpose.msra.mxu0 %v50
    %54 = vmatprep.subr.mxu0 0.0
    %55 = vmatpush1.xpose.msra.mxu0 %v51
    %56 = vmatprep.subr.mxu0 0.0
    %57 = vmatpush1.xpose.msra.mxu0 0.0
    %58 = vmatprep.subr.mxu0 0.0
    %59 = vmatpush1.xpose.msra.mxu0 0.0
    %60 = vmatprep.subr.mxu0 0.0
    %61 = vmatpush1.xpose.msra.mxu0 0.0
    %62 = vmatprep.subr.mxu0 0.0
    %63 = vmatpush1.xpose.msra.mxu0 0.0
    %64 = vmatprep.subr.mxu0 0.0
    %65 = vmatpush1.xpose.msra.mxu0 0.0
    %66 = vmatprep.subr.mxu0 0.0
    %67 = vmatpush1.xpose.msra.mxu0 0.0
    %68 = vmatprep.subr.mxu0 0.0
    %69 = vmatpush1.xpose.msra.mxu0 0.0
    %70 = vmatprep.subr.mxu0 0.0
    %71 = vmatpush1.xpose.msra.mxu0 0.0
    %72 = vmatprep.subr.mxu0 0.0
    %73 = vmatpush1.xpose.msra.mxu0 0.0
    %74 = vmatprep.subr.mxu0 0.0
    %75 = vmatpush1.xpose.msra.mxu0 0.0
    %76 = vmatprep.subr.mxu0 0.0
    %77 = vmatpush1.xpose.msra.mxu0 0.0
    %78 = vmatprep.subr.mxu0 0.0
    %79 = vmatpush1.xpose.msra.mxu0 0.0
    %80 = vmatprep.subr.mxu0 0.0
    %81 = vmatpush1.xpose.msra.mxu0 0.0
    %82 = vmatprep.subr.mxu0 0.0
    %83 = vmatpush1.xpose.msra.mxu0 0.0
    %84 = vmatprep.subr.mxu0 0.0
    %85 = vmatpush1.xpose.msra.mxu0 0.0
    %86 = vmatprep.subr.mxu0 0.0
    %87 = vmatpush1.xpose.msra.mxu0 0.0
    %88 = vmatprep.subr.mxu0 0.0
    %89 = vmatpush1.xpose.msra.mxu0 0.0
    %90 = vmatprep.subr.mxu0 0.0
    %91 = vmatpush1.xpose.msra.mxu0 0.0
    %92 = vmatprep.subr.mxu0 0.0
    %93 = vmatpush1.xpose.msra.mxu0 0.0
    %94 = vmatprep.subr.mxu0 0.0
    %95 = vmatpush1.xpose.msra.mxu0 0.0
    %96 = vmatprep.subr.mxu0 0.0
    %97 = vmatpush1.xpose.msra.mxu0 0.0
    %98 = vmatprep.subr.mxu0 0.0
    %99 = vmatpush1.xpose.msra.mxu0 0.0
    %100 = vmatprep.subr.mxu0 0.0
    %101 = vmatpush1.xpose.msra.mxu0 0.0
    %102 = vmatprep.subr.mxu0 0.0
    %103 = vmatpush1.xpose.msra.mxu0 0.0
    %104 = vmatprep.subr.mxu0 0.0
    %105 = vmatpush1.xpose.msra.mxu0 0.0
    %106 = vmatprep.subr.mxu0 0.0
    %107 = vmatpush1.xpose.msra.mxu0 0.0
    %108 = vmatprep.subr.mxu0 0.0
    %109 = vmatpush1.xpose.msra.mxu0 0.0
    %110 = vmatprep.subr.mxu0 0.0
    %111 = vmatpush1.xpose.msra.mxu0 0.0
    %112 = vmatprep.subr.mxu0 0.0
    %113 = vmatpush1.xpose.msra.mxu0 0.0
    %114 = vmatprep.subr.mxu0 0.0
    %115 = vmatpush1.xpose.msra.mxu0 0.0
    %116 = vmatprep.mubr.f32.mxu0 0.0
    %117 = vmatmul.mubr.f32.gmra.mrb[0].mxu0 %v48
    %v118 = vpop.f32.mrb[0].mxu0
    %v119 = vadd.f32 0.0, %v118
    %v120 = vpop.f32.mrb[0].mxu0
    %121 = vmatprep.mubr.f32.mxu0 0.0
    %122 = vmatmul.mubr.f32.gmra.mrb[0].mxu0 %v49
    %v123 = vpop.f32.mrb[0].mxu0
    %v124 = vadd.f32 0.0, %v123
    %v125 = vpop.f32.mrb[0].mxu0
    %126 = vdwg.mxu0
    %s127 = sld [smem:[#allocation2]]
    %v128 = vstv %s127
    %v129 = vmul.f32 %v119, %v128
    %v130 = vmul.f32 %v124, %v128
    %s131 = sld [smem:[#allocation3]]
    %v132 = vstv %s131
    %v133 = vadd.f32 %v129, %v132
    %v134 = vadd.f32 %v130, %v132
    %v135 = vlaneseq
    %v136 = vshrl.u32 %v135, 7
    %v137 = vadd.s32 %v136, 8
    %s138 = smul.u32 0, 16
    %v139 = vstv %s138
    %v140 = vadd.s32 %v136, %v139
    %v141 = vadd.s32 %v137, %v139
    %v142 = vlaneseq
    %v143 = vand.u32 %v142, 127
    %vm144 = vcmp.eq.s32.totalorder %v140, %v143
    %vm145 = vcmp.eq.s32.totalorder %v141, %v143
    %v146 = vsub.f32 0.0, %v133
    %v147 = vsub.f32 0.0, %v134
    %v148 = vsel %vm144, %v133, %v146
    %v149 = vsel %vm145, %v134, %v147
    %v150 = vmin.f32 %v148, 0.0
    %v151 = vmin.f32 %v149, 0.0
    %v152 = vand.u32 2147483647, %v148
    %v153 = vand.u32 2147483647, %v149
    %v154 = vsub.f32 0.0, %v152
    %v155 = vsub.f32 0.0, %v153
    %v156 = vmul.f32 %v154, 1.442695
    %v157 = vpow.pop %v156
    %v158 = vmul.f32 %v155, 1.442695
    %v159 = vpow.pop %v158
    %v160 = vadd.f32 %v157, 1.0
    %v161 = vlog2.pop %v160
    %v162 = vmul.f32 %v161, 0.6931472
    %v163 = vmul.f32 -0.5, %v157
    %v164 = vadd.f32 %v163, 1.0
    %v165 = vmul.f32 %v164, %v157
    %v166 = vand.u32 2147483647, %v157
    %vm167 = vcmp.lt.f32.partialorder %v166, 0.0004427343
    %v168 = vsel %vm167, %v165, %v162
    %v169 = vadd.f32 %v159, 1.0
    %v170 = vlog2.pop %v169
    %v171 = vmul.f32 %v170, 0.6931472
    %v172 = vmul.f32 -0.5, %v159
    %v173 = vadd.f32 %v172, 1.0
    %v174 = vmul.f32 %v173, %v159
    %v175 = vand.u32 2147483647, %v159
    %vm176 = vcmp.lt.f32.partialorder %v175, 0.0004427343
    %v177 = vsel %vm176, %v174, %v171
    %v178 = vsub.f32 %v150, %v168
    %v179 = vsub.f32 %v151, %v177
    %vm180 = vcmask 130048
    %v181 = vsel %vm180, %v178, 0.0
    %v182 = vsel %vm180, %v179, 0.0
    %v183 = vadd.f32 %v181, %v182
    %184 = vadd.xlane.f32.xlu0 %v183
    %v185 = vpop.xlane.xlu0 %184
    %v186 = vrot.slane %v185, 4
    %v187 = vadd.f32 %v185, %v186
    %v188 = vrot.slane %v187, 2
    %v189 = vadd.f32 %v187, %v188
    %v190 = vrot.slane %v189, 1
    %v191 = vadd.f32 %v189, %v190
    %s192 = vtos %v191
    %s193 = ssub.f32 0.0, %s192
    %s194 = scalar_lea.smem [#allocation9], 0
    %195 = sst [smem:[%s194]] %s193
    // Predicated region
    $region26: #{tpu_custom_call.1} parent=1 // pred_check
      _
    $region27: #{tpu_custom_call.1} parent=1 // pred_check_branch
      %197 = sbr.rel (0) target = $region29
    $region28: #{tpu_custom_call.1} parent=1 // pred_region
      %s199 = ssub.s32 16, 16
      %200 = vsyncadd [#allocation6], %s199
      %203 = dma.smem_to_hbm [#allocation9], 16, %s4, [#allocation6]
    $region29: #{tpu_custom_call.1} parent=1 // pred_fallthru
      _
    // Predicated region
    $region30: #{tpu_custom_call.1} parent=1 // pred_check
      _
    $region31: #{tpu_custom_call.1} parent=1 // pred_check_branch
      %205 = sbr.rel (0) target = $region33
    $region32: #{tpu_custom_call.1} parent=1 // pred_region
      %206 = dma.done [#allocation6], 16
    $region33: #{tpu_custom_call.1} parent=1 // pred_fallthru
      _
    %207 = sfence
    %208 = vsyncpa [#allocation5], 1
    %209 = vsyncpa [#allocation8], 1
    %210 = vsyncpa [#allocation6], 1

</llo_original>
